<compile_context>
chip_gen: v7x
topology: tpu7x:2x2x1
jax: 0.10.0
libtpu: 0.0.40
codegen_flags: <defaults>
</compile_context>

<pallas_src>
import functools

import jax
import jax.numpy as jnp
from jax.experimental import pallas as pl
from jax.experimental.pallas import tpu as pltpu


def _round_up(x: int, m: int) -> int:
    return ((x + m - 1) // m) * m


def _reduce_state_kernel(h_ref, c_ref, h_out_ref, c_out_ref):
    # Block shapes: h_ref/c_ref are (L, B_tile, H); outputs are (1, B_tile, H).
    # Reduce the full L extent in one pass, accumulating in float32.
    h_sum = jnp.sum(h_ref[...].astype(jnp.float32), axis=0, keepdims=True)
    c_sum = jnp.sum(c_ref[...].astype(jnp.float32), axis=0, keepdims=True)
    h_out_ref[...] = h_sum.astype(h_out_ref.dtype)
    c_out_ref[...] = c_sum.astype(c_out_ref.dtype)


def _pick_b_tile(L, B, H, in_itemsize, out_itemsize, vmem_budget_bytes,
                 total_in_bytes, max_b_tile):
    """Largest batch tile (multiple of 8, or full B) fitting the VMEM budget."""
    lanes = _round_up(H, 128)  # lane-padded width of one row in VMEM layout
    # Default double buffering: 2 bufs x (2 inputs of L rows + 2 outputs of 1 row)
    # per batch row, in lane-padded bytes.
    per_row = 2 * (2 * L * lanes * in_itemsize + 2 * lanes * out_itemsize)
    b_tile = max(8, (vmem_budget_bytes // per_row) // 8 * 8)
    # On big inputs keep >= 2 grid steps so the "parallel" axis can feed both
    # TensorCores on v7x instead of collapsing to one giant single-step block.
    if b_tile >= B and B >= 16 and total_in_bytes >= (4 << 20):
        b_tile = _round_up(-(-B // 2), 8)
    if max_b_tile is not None:
        b_tile = min(b_tile, max(8, (max_b_tile // 8) * 8))
    if b_tile >= B:
        return B  # one full-batch block (full-extent dim is always legal)
    return b_tile  # multiple of 8 -> sublane-dense output stores
    # TODO(synk): if a single (L, 8, H) row-slab ever exceeds the VMEM budget
    # (enormous H), H would also need tiling; LSTM hidden sizes never hit this.


@functools.partial(jax.jit, static_argnames=("vmem_budget_bytes", "max_b_tile"))
def _reduce_state_pallas(h, c, vmem_budget_bytes=12 << 20, max_b_tile=None):
    L, B, H = h.shape
    in_itemsize = jnp.dtype(h.dtype).itemsize
    out_itemsize = in_itemsize
    total_in_bytes = 2 * L * B * H * in_itemsize

    b_tile = _pick_b_tile(L, B, H, in_itemsize, out_itemsize,
                          vmem_budget_bytes, total_in_bytes, max_b_tile)
    grid = (pl.cdiv(B, b_tile),)

    # Ragged last block is safe: the L-reduction is per-(b, h) element, so any
    # garbage in out-of-bounds input rows only produces garbage in output rows
    # that the writeback drops (never feeds the valid region).
    in_spec = pl.BlockSpec((L, b_tile, H), lambda i: (0, i, 0))
    out_spec = pl.BlockSpec((1, b_tile, H), lambda i: (0, i, 0))

    h_red, c_red = pl.pallas_call(
        _reduce_state_kernel,
        out_shape=(
            jax.ShapeDtypeStruct((1, B, H), h.dtype),
            jax.ShapeDtypeStruct((1, B, H), c.dtype),
        ),
        grid_spec=pltpu.PrefetchScalarGridSpec(
            num_scalar_prefetch=0,
            grid=grid,
            in_specs=[in_spec, in_spec],
            out_specs=[out_spec, out_spec],
        ),
        compiler_params=pltpu.CompilerParams(
            # Independent batch tiles -> shard across TensorCores (v7x megacore).
            dimension_semantics=("parallel",),
        ),
    )(h, c)
    return h_red, c_red


def reduce_state(h, c, *, force_pallas=False, vmem_budget_bytes=12 << 20,
                 max_b_tile=None, small_input_bytes=4 << 20):
    """Pallas equivalent of ReduceState.forward((h, c)).

    h, c: (L, B, H) arrays. Returns (h_reduced, c_reduced), each (1, B, H).
    """
    assert h.shape == c.shape
    nbytes = (h.size * jnp.dtype(h.dtype).itemsize
              + c.size * jnp.dtype(c.dtype).itemsize)
    # For small states the pallas_call launch + per-step overhead dwarfs the
    # sub-microsecond reduction; let XLA fuse a plain sum instead.
    if not force_pallas and nbytes < small_input_bytes:
        return (jnp.sum(h, axis=0, keepdims=True),
                jnp.sum(c, axis=0, keepdims=True))
    return _reduce_state_pallas(h, c, vmem_budget_bytes=vmem_budget_bytes,
                                max_b_tile=max_b_tile)


if __name__ == "__main__":
    key = jax.random.PRNGKey(0)
    kh, kc, kh2, kc2, kh3, kc3 = jax.random.split(key, 6)

    # 1) Bidirectional single-layer LSTM state: L = 2, batch = 8, hidden = 32.
    L, B, H = 2, 8, 32
    h = jax.random.normal(kh, (L, B, H), dtype=jnp.float32)
    c = jax.random.normal(kc, (L, B, H), dtype=jnp.float32)
    h_red, c_red = reduce_state(h, c, force_pallas=True)
    jax.block_until_ready((h_red, c_red))
    h_ref = jnp.sum(h, axis=0, keepdims=True)
    c_ref = jnp.sum(c, axis=0, keepdims=True)
    assert h_red.shape == (1, B, H) and c_red.shape == (1, B, H)
    assert jnp.allclose(h_red, h_ref, atol=1e-6)
    assert jnp.allclose(c_red, c_ref, atol=1e-6)

    # 2) bf16 path with ragged dims (B not multiple of 8, H not multiple of 128):
    #    checks f32 in-kernel accumulation + full-extent (non-aligned) blocks.
    L2, B2, H2 = 8, 6, 40
    hb = jax.random.normal(kh2, (L2, B2, H2), dtype=jnp.bfloat16)
    cb = jax.random.normal(kc2, (L2, B2, H2), dtype=jnp.bfloat16)
    hb_red, cb_red = reduce_state(hb, cb, force_pallas=True)
    jax.block_until_ready((hb_red, cb_red))
    hb_ref = jnp.sum(hb.astype(jnp.float32), axis=0, keepdims=True).astype(jnp.bfloat16)
    cb_ref = jnp.sum(cb.astype(jnp.float32), axis=0, keepdims=True).astype(jnp.bfloat16)
    assert jnp.allclose(hb_red.astype(jnp.float32), hb_ref.astype(jnp.float32),
                        atol=2e-2, rtol=2e-2)
    assert jnp.allclose(cb_red.astype(jnp.float32), cb_ref.astype(jnp.float32),
                        atol=2e-2, rtol=2e-2)

    # 3) Multi-step grid with a ragged last batch block (B=40, B_tile capped at 16
    #    -> grid=3, last block half out-of-bounds) and lane-dense H=256.
    L3, B3, H3 = 2, 40, 256
    h3 = jax.random.normal(kh3, (L3, B3, H3), dtype=jnp.float32)
    c3 = jax.random.normal(kc3, (L3, B3, H3), dtype=jnp.float32)
    h3_red, c3_red = reduce_state(h3, c3, force_pallas=True, max_b_tile=16)
    jax.block_until_ready((h3_red, c3_red))
    assert jnp.allclose(h3_red, jnp.sum(h3, axis=0, keepdims=True), atol=1e-5)
    assert jnp.allclose(c3_red, jnp.sum(c3, axis=0, keepdims=True), atol=1e-5)

    print("KERNEL_OK")
</pallas_src>

<mosaic_0001>
module attributes {stable_mosaic.version = 11 : i64} {
  func.func @_reduce_state_kernel(%arg0: i32, %arg1: memref<2x8x32xf32, #tpu.memory_space<vmem>>, %arg2: memref<2x8x32xf32, #tpu.memory_space<vmem>>, %arg3: memref<1x8x32xf32, #tpu.memory_space<vmem>>, %arg4: memref<1x8x32xf32, #tpu.memory_space<vmem>>) attributes {dimension_semantics = [#tpu.dimension_semantics<parallel>], iteration_bounds = array<i64: 1>, scalar_prefetch = 0 : i64, scratch_operands = 0 : i64, tpu.core_type = #tpu.core_type<tc>, window_params = [{transform_indices = @transform_0, window_bounds = array<i64: 2, 8, 32>}, {transform_indices = @transform_1, window_bounds = array<i64: 2, 8, 32>}, {transform_indices = @transform_2, window_bounds = array<i64: 1, 8, 32>}, {transform_indices = @transform_3, window_bounds = array<i64: 1, 8, 32>}]} {
    %c0 = arith.constant 0 : index
    %c0_0 = arith.constant 0 : index
    %c0_1 = arith.constant 0 : index
    %0 = vector.load %arg1[%c0, %c0_0, %c0_1] : memref<2x8x32xf32, #tpu.memory_space<vmem>>, vector<2x8x32xf32>
    %cst = arith.constant dense<0.000000e+00> : vector<8x32xf32>
    %1 = vector.multi_reduction <add>, %0, %cst [0] : vector<2x8x32xf32> to vector<8x32xf32>
    %2 = vector.shape_cast %1 : vector<8x32xf32> to vector<1x8x32xf32>
    %c0_2 = arith.constant 0 : index
    %c0_3 = arith.constant 0 : index
    %c0_4 = arith.constant 0 : index
    %3 = vector.load %arg2[%c0_2, %c0_3, %c0_4] : memref<2x8x32xf32, #tpu.memory_space<vmem>>, vector<2x8x32xf32>
    %cst_5 = arith.constant dense<0.000000e+00> : vector<8x32xf32>
    %4 = vector.multi_reduction <add>, %3, %cst_5 [0] : vector<2x8x32xf32> to vector<8x32xf32>
    %5 = vector.shape_cast %4 : vector<8x32xf32> to vector<1x8x32xf32>
    %c0_6 = arith.constant 0 : index
    %c0_7 = arith.constant 0 : index
    %c0_8 = arith.constant 0 : index
    %6 = vector.load %arg3[%c0_6, %c0_7, %c0_8] : memref<1x8x32xf32, #tpu.memory_space<vmem>>, vector<1x8x32xf32>
    tpu.vector_store %arg3[%c0_6, %c0_7, %c0_8], %2 {strides = array<i32>} : memref<1x8x32xf32, #tpu.memory_space<vmem>>, vector<1x8x32xf32>,
    %c0_9 = arith.constant 0 : index
    %c0_10 = arith.constant 0 : index
    %c0_11 = arith.constant 0 : index
    %7 = vector.load %arg4[%c0_9, %c0_10, %c0_11] : memref<1x8x32xf32, #tpu.memory_space<vmem>>, vector<1x8x32xf32>
    tpu.vector_store %arg4[%c0_9, %c0_10, %c0_11], %5 {strides = array<i32>} : memref<1x8x32xf32, #tpu.memory_space<vmem>>, vector<1x8x32xf32>,
    return
  }
  func.func @transform_0(%arg0: i32) -> (i32, i32, i32) {
    %c0_i32 = arith.constant 0 : i32
    %c0_i32_0 = arith.constant 0 : i32
    %c0_i32_1 = arith.constant 0 : i32
    return %c0_i32, %arg0, %c0_i32_0 : i32, i32, i32
  }
  func.func @transform_1(%arg0: i32) -> (i32, i32, i32) {
    %c0_i32 = arith.constant 0 : i32
    %c0_i32_0 = arith.constant 0 : i32
    %c0_i32_1 = arith.constant 0 : i32
    return %c0_i32, %arg0, %c0_i32_0 : i32, i32, i32
  }
  func.func @transform_2(%arg0: i32) -> (i32, i32, i32) {
    %c0_i32 = arith.constant 0 : i32
    %c0_i32_0 = arith.constant 0 : i32
    %c0_i32_1 = arith.constant 0 : i32
    return %c0_i32, %arg0, %c0_i32_0 : i32, i32, i32
  }
  func.func @transform_3(%arg0: i32) -> (i32, i32, i32) {
    %c0_i32 = arith.constant 0 : i32
    %c0_i32_0 = arith.constant 0 : i32
    %c0_i32_1 = arith.constant 0 : i32
    return %c0_i32, %arg0, %c0_i32_0 : i32, i32, i32
  }
}

</mosaic_0001>

<llo_original>
// kernel: _reduce_state_pallas.1
$region0: #{_reduce_state_pallas.1}
  #allocation0 [shape = 'u32[]', space=smem, size = 0x4, offset = 0x4, fixed_abs, tag = 'smem constant byte address 0x4 - core index']
  #allocation1 [shape = 'u32[144,128]{1,0:T(1,128)}', space=vmem, size = 0x12000, scoped, tag = 'internal scratch']
  %s0 = inlined_call_operand.hbm [shape: f32[2,8,32], index: 0, kind: input, shape index: {}]
  %s1 = inlined_call_operand.hbm [shape: f32[2,8,32], index: 1, kind: input, shape index: {}]
  %s2 = inlined_call_operand.hbm [shape: f32[1,8,32], index: 2, kind: output, shape index: {0}]
  %s3 = inlined_call_operand.hbm [shape: f32[1,8,32], index: 3, kind: output, shape index: {1}]
  %4 = xla_tuple %s2, %s3
  %s5 = sld [smem:[#allocation0]]
  $region34: #{_reduce_state_pallas.1} parent=0
    _
  %s7 = ssub.s32 1, %s5
  %s8 = scalar_select 0, %s7, %s5
  $region1: #{_reduce_state_pallas.1} parent=0
    #allocation2 [shape = 'u8[8192]{0}', space=vmem, size = 0x2000, scoped, tag = 'input window, operand 0, single buffered']
    #allocation3 [shape = 's32[1]{0}', space=sflag, size = 0x4, scoped, tag = 'scoped memory for _reduce_state_pallas.1']
    #allocation4 [shape = 's32[1]{0}', space=sflag, size = 0x4, scoped, tag = 'scoped memory for _reduce_state_pallas.1']
    #allocation5 [shape = 'u8[8192]{0}', space=vmem, size = 0x2000, scoped, tag = 'input window, operand 1, single buffered']
    #allocation6 [shape = 's32[1]{0}', space=sflag, size = 0x4, scoped, tag = 'scoped memory for _reduce_state_pallas.1']
    #allocation7 [shape = 'u8[4096]{0}', space=vmem, size = 0x1000, scoped, tag = 'output window, operand 0, single buffered']
    #allocation8 [shape = 'u8[4096]{0}', space=vmem, size = 0x1000, scoped, tag = 'output window, operand 1, single buffered']
    #allocation9 [shape = 's32[1]{0}', space=sflag, size = 0x4, scoped, tag = 'scoped memory for _reduce_state_pallas.1']
    %9 = vsyncpa [#allocation3], 0
    %10 = vsyncpa [#allocation6], 0
    %11 = vsyncpa [#allocation4], 0
    %12 = vsyncpa [#allocation9], 0
    // Predicated region
    $region2: #{_reduce_state_pallas.1} parent=1 // pred_check
      _
    $region3: #{_reduce_state_pallas.1} parent=1 // pred_check_branch
      %14 = sbr.rel (0) target = $region5
    $region4: #{_reduce_state_pallas.1} parent=1 // pred_region
      %s16 = ssub.s32 256, 256
      %17 = vsyncadd [#allocation3], %s16
      %s18 = sshll.u32 [#allocation2], 4
      %s19 = int_to_ptr.vmem [resolvable:$true] %s18
      %24 = dma.hbm_to_vmem [thread:$0]  %s0, 256, %s19, [#allocation3], 128, 128, 8
    $region5: #{_reduce_state_pallas.1} parent=1 // pred_fallthru
      _
    // Predicated region
    $region6: #{_reduce_state_pallas.1} parent=1 // pred_check
      _
    $region7: #{_reduce_state_pallas.1} parent=1 // pred_check_branch
      %26 = sbr.rel (0) target = $region9
    $region8: #{_reduce_state_pallas.1} parent=1 // pred_region
      %s28 = ssub.s32 256, 256
      %29 = vsyncadd [#allocation6], %s28
      %s30 = sshll.u32 [#allocation5], 4
      %s31 = int_to_ptr.vmem [resolvable:$true] %s30
      %36 = dma.hbm_to_vmem [thread:$0]  %s1, 256, %s31, [#allocation6], 128, 128, 8
    $region9: #{_reduce_state_pallas.1} parent=1 // pred_fallthru
      _
    // Predicated region
    $region10: #{_reduce_state_pallas.1} parent=1 // pred_check
      _
    $region11: #{_reduce_state_pallas.1} parent=1 // pred_check_branch
      %38 = sbr.rel (0) target = $region13
    $region12: #{_reduce_state_pallas.1} parent=1 // pred_region
      %39 = dma.done [#allocation3], 256
    $region13: #{_reduce_state_pallas.1} parent=1 // pred_fallthru
      _
    // Predicated region
    $region14: #{_reduce_state_pallas.1} parent=1 // pred_check
      _
    $region15: #{_reduce_state_pallas.1} parent=1 // pred_check_branch
      %41 = sbr.rel (0) target = $region17
    $region16: #{_reduce_state_pallas.1} parent=1 // pred_region
      %42 = dma.done [#allocation6], 256
    $region17: #{_reduce_state_pallas.1} parent=1 // pred_fallthru
      _
    %v43 = vld [vmem:[#allocation2] sm:$0xff]
    %v44 = vld [vmem:[#allocation2 + $0x8] sm:$0xff]
    %vm45 = vcmask 261120
    %v46 = vsel %vm45, %v43, 0.0
    %v47 = vsel %vm45, %v44, 0.0
    %v48 = vadd.f32 %v46, %v47
    %v49 = vld [vmem:[#allocation5] sm:$0xff]
    %v50 = vld [vmem:[#allocation5 + $0x8] sm:$0xff]
    %v51 = vsel %vm45, %v49, 0.0
    %v52 = vsel %vm45, %v50, 0.0
    %v53 = vadd.f32 %v51, %v52
    %54 = vst.msk [vmem:[#allocation7] sm:$0xff] %vm45, %v48
    %55 = vst.msk [vmem:[#allocation8] sm:$0xff] %vm45, %v53
    // Predicated region
    $region18: #{_reduce_state_pallas.1} parent=1 // pred_check
      _
    $region19: #{_reduce_state_pallas.1} parent=1 // pred_check_branch
      %57 = sbr.rel (0) target = $region21
    $region20: #{_reduce_state_pallas.1} parent=1 // pred_region
      %s59 = ssub.s32 128, 128
      %60 = vsyncadd [#allocation4], %s59
      %s62 = sshll.u32 [#allocation7], 4
      %s63 = int_to_ptr.vmem [resolvable:$true] %s62
      %65 = dma.vmem_to_hbm [thread:$0]  %s63, 128, %s2, [#allocation4]
    $region21: #{_reduce_state_pallas.1} parent=1 // pred_fallthru
      _
    // Predicated region
    $region22: #{_reduce_state_pallas.1} parent=1 // pred_check
      _
    $region23: #{_reduce_state_pallas.1} parent=1 // pred_check_branch
      %67 = sbr.rel (0) target = $region25
    $region24: #{_reduce_state_pallas.1} parent=1 // pred_region
      %s69 = ssub.s32 128, 128
      %70 = vsyncadd [#allocation9], %s69
      %s72 = sshll.u32 [#allocation8], 4
      %s73 = int_to_ptr.vmem [resolvable:$true] %s72
      %75 = dma.vmem_to_hbm [thread:$0]  %s73, 128, %s3, [#allocation9]
    $region25: #{_reduce_state_pallas.1} parent=1 // pred_fallthru
      _
    // Predicated region
    $region26: #{_reduce_state_pallas.1} parent=1 // pred_check
      _
    $region27: #{_reduce_state_pallas.1} parent=1 // pred_check_branch
      %77 = sbr.rel (0) target = $region29
    $region28: #{_reduce_state_pallas.1} parent=1 // pred_region
      %78 = dma.done [#allocation4], 128
    $region29: #{_reduce_state_pallas.1} parent=1 // pred_fallthru
      _
    // Predicated region
    $region30: #{_reduce_state_pallas.1} parent=1 // pred_check
      _
    $region31: #{_reduce_state_pallas.1} parent=1 // pred_check_branch
      %80 = sbr.rel (0) target = $region33
    $region32: #{_reduce_state_pallas.1} parent=1 // pred_region
      %81 = dma.done [#allocation9], 128
    $region33: #{_reduce_state_pallas.1} parent=1 // pred_fallthru
      _
    %82 = vsyncpa [#allocation3], 1
    %83 = vsyncpa [#allocation6], 1
    %84 = vsyncpa [#allocation4], 1
    %85 = vsyncpa [#allocation9], 1

</llo_original>
